<compile_context>
chip_gen: v5e
topology: v5e:2x2
jax: 0.10.0
libtpu: 0.0.40
codegen_flags: <defaults>
</compile_context>

<pallas_src>
from functools import partial

import jax
import jax.numpy as jnp
from jax.experimental import pallas as pl
from jax.experimental.pallas import tpu as pltpu


def focal_cosine_kernel(x_ref, t_ref, out_ref, *, alpha, gamma, n_total, tile_n,
                        ragged):
    x = x_ref[...].astype(jnp.float32)            # (TILE_N, C), f32 compute
    t = t_ref[...]                                # (TILE_N, 1) int32
    tn, c = x.shape

    if ragged:                                    # static: only when N % tile_n != 0
        row0 = pl.program_id(0) * tile_n
        row_idx = row0 + jax.lax.broadcasted_iota(jnp.int32, (tn, 1), 0)
        valid = row_idx < n_total                 # (TILE_N, 1) bool
        x = jnp.where(valid, x, 0.0)              # zero garbage rows up front

    # target-logit gather via one masked-select sum (no f32 one-hot temp)
    col = jax.lax.broadcasted_iota(jnp.int32, (tn, c), 1)
    tgt_logit = jnp.sum(jnp.where(col == t, x, 0.0), axis=-1, keepdims=True)

    sumsq = jnp.sum(x * x, axis=-1, keepdims=True)            # (TILE_N, 1)
    row_norm = jnp.sqrt(sumsq)
    m_x = jnp.max(x, axis=-1, keepdims=True)                  # max of raw x (inv>0)

    # per-row reciprocals (cheap (TILE_N,1) EUP work); wide ops below are muls
    inv8 = pl.reciprocal(jnp.maximum(row_norm, 1e-8))    # F.cosine_similarity eps
    inv12 = pl.reciprocal(jnp.maximum(row_norm, 1e-12))  # F.normalize eps

    # ---- cosine embedding loss term (y = +1, onehot has unit norm) ---------
    cos_sim = tgt_logit * inv8                               # (TILE_N, 1)

    # ---- cross entropy on L2-normalized logits, without materializing xn ---
    #   lse(xn) = log(sum(exp((x - m_x) * inv12)))  since max(xn) = m_x*inv12
    e = jnp.exp((x - m_x) * inv12)
    lse = jnp.log(jnp.sum(e, axis=-1, keepdims=True))
    logp_t = (tgt_logit - m_x) * inv12 - lse                 # (TILE_N, 1)
    cent = -logp_t

    # ---- focal term ---------------------------------------------------------
    pt = jnp.exp(-cent)
    one_minus_pt = jnp.maximum(1.0 - pt, 0.0)       # clamp: pt can slightly exceed 1
    if gamma == 2.0:                                # static Python check
        focal_w = one_minus_pt * one_minus_pt       # one VPU mul, no log(0) path
    else:
        focal_w = jnp.power(one_minus_pt, gamma)    # fallback for generic gamma
    focal = alpha * focal_w * cent                  # (TILE_N, 1)

    # ---- per-tile partial sums (padded rows masked when ragged) -------------
    if ragged:
        cos_part = jnp.sum(jnp.where(valid, 1.0 - cos_sim, 0.0))
        focal_part = jnp.sum(jnp.where(valid, focal, 0.0))
    else:
        cos_part = jnp.sum(1.0 - cos_sim)
        focal_part = jnp.sum(focal)

    # lane-aligned (1, 8, 128) partial block: lane 0 = sum(1-cos), lane 1 = sum(focal)
    lane = jax.lax.broadcasted_iota(jnp.int32, out_ref.shape, 2)
    out_ref[...] = jnp.where(lane == 0, cos_part,
                             jnp.where(lane == 1, focal_part, 0.0))


def focal_cosine_loss(x, target, *, alpha=1.0, gamma=2.0, xent=0.1, tile_n=None):
    """x: (N, C) logits (any float dtype); target: (N,) int labels. Returns scalar."""
    n, c = x.shape
    itemsize = jnp.dtype(x.dtype).itemsize
    sublane = max(8, 32 // itemsize)          # 8 for f32, 16 for bf16, 32 for i8/fp8

    if tile_n is None:
        # bytes-targeted input tile: ~3 MiB of native-dtype logits per grid step
        tile_n = max(sublane, (3 << 20) // max(1, c * itemsize))
    # keep >= 2 grid steps when possible so 'parallel' semantics feed both v7x TCs
    if n >= 2 * sublane:
        tile_n = min(tile_n, int(pl.cdiv(n, 2)))
    tile_n = int(min(tile_n, n))
    if tile_n < n:
        tile_n = max(sublane, (tile_n // sublane) * sublane)  # dtype sublane align
        tile_n = min(tile_n, n)
    num_tiles = int(pl.cdiv(n, tile_n))
    ragged = (n % tile_n) != 0

    t2 = target.astype(jnp.int32).reshape(n, 1)

    kernel = partial(focal_cosine_kernel, alpha=float(alpha), gamma=float(gamma),
                     n_total=n, tile_n=tile_n, ragged=ragged)

    partials = pl.pallas_call(
        kernel,
        out_shape=jax.ShapeDtypeStruct((num_tiles, 8, 128), jnp.float32),
        grid=(num_tiles,),
        in_specs=[
            pl.BlockSpec((tile_n, c), lambda i: (i, 0)),   # logits tile (native dtype)
            pl.BlockSpec((tile_n, 1), lambda i: (i, 0)),   # targets tile
        ],
        out_specs=pl.BlockSpec((1, 8, 128), lambda i: (i, 0, 0)),
        compiler_params=pltpu.CompilerParams(
            dimension_semantics=("parallel",),             # megacore-shardable on v7x
            vmem_limit_bytes=48 << 20),                    # safe on v5e/v6e/v7x
        cost_estimate=pl.CostEstimate(
            flops=int(10 * n * c),
            transcendentals=int(n * c),
            bytes_accessed=int(n * c * itemsize + n * 4
                               + num_tiles * 8 * 128 * 4)),
    )(x, t2)   # NOTE: no wrapper-side upcast — HBM traffic stays in native dtype

    cos_total = jnp.sum(partials[:, 0, 0])
    focal_total = jnp.sum(partials[:, 0, 1])
    inv_n = 1.0 / n
    return cos_total * inv_n + xent * (focal_total * inv_n)


def _reference(x, target, alpha=1.0, gamma=2.0, xent=0.1):
    x = x.astype(jnp.float32)
    n, c = x.shape
    onehot = jax.nn.one_hot(target, c, dtype=jnp.float32)
    row_norm = jnp.sqrt(jnp.sum(x * x, axis=-1, keepdims=True))
    cos = jnp.sum(x * onehot, -1, keepdims=True) / jnp.maximum(row_norm, 1e-8)
    cosine_loss = jnp.mean(1.0 - cos)
    xn = x / jnp.maximum(row_norm, 1e-12)
    logp = jax.nn.log_softmax(xn, axis=-1)
    cent = -jnp.sum(logp * onehot, axis=-1)
    pt = jnp.exp(-cent)
    focal = alpha * (1.0 - pt) ** gamma * cent
    return cosine_loss + xent * jnp.mean(focal)


if __name__ == "__main__":
    key = jax.random.PRNGKey(0)
    k1, k2 = jax.random.split(key)
    N, C = 8, 32                      # small synthetic batch of logits
    x = jax.random.normal(k1, (N, C), dtype=jnp.float32)
    target = jax.random.randint(k2, (N,), 0, C, dtype=jnp.int32)

    loss = focal_cosine_loss(x, target, alpha=1.0, gamma=2.0, xent=0.1)
    loss = jax.block_until_ready(loss)

    ref = _reference(x, target)
    assert jnp.allclose(loss, ref, atol=1e-5, rtol=1e-5), (loss, ref)
    print("KERNEL_OK")
</pallas_src>

<mosaic_0001>
module attributes {stable_mosaic.version = 11 : i64} {
  func.func @focal_cosine_kernel(%arg0: i32, %arg1: memref<8x32xf32, #tpu.memory_space<vmem>>, %arg2: memref<8x1xi32, #tpu.memory_space<vmem>>, %arg3: memref<1x8x128xf32, #tpu.memory_space<vmem>>) attributes {dimension_semantics = [#tpu.dimension_semantics<parallel>], iteration_bounds = array<i64: 1>, scalar_prefetch = 0 : i64, scratch_operands = 0 : i64, tpu.core_type = #tpu.core_type<tc>, window_params = [{transform_indices = @transform_0, window_bounds = array<i64: 8, 32>}, {transform_indices = @transform_1, window_bounds = array<i64: 8, 1>}, {transform_indices = @transform_2, window_bounds = array<i64: 1, 8, 128>}]} {
    %c0 = arith.constant 0 : index
    %c0_0 = arith.constant 0 : index
    %0 = vector.load %arg1[%c0, %c0_0] : memref<8x32xf32, #tpu.memory_space<vmem>>, vector<8x32xf32>
    %c0_1 = arith.constant 0 : index
    %c0_2 = arith.constant 0 : index
    %1 = vector.load %arg2[%c0_1, %c0_2] : memref<8x1xi32, #tpu.memory_space<vmem>>, vector<8x1xi32>
    %2 = tpu.iota {dimensions = array<i32: 1>} : vector<8x32xi32>
    %3 = vector.broadcast %1 : vector<8x1xi32> to vector<8x32xi32>
    %4 = arith.cmpi eq, %2, %3 : vector<8x32xi32>
    %cst = arith.constant 0.000000e+00 : f32
    %5 = vector.broadcast %cst : f32 to vector<8x32xf32>
    %6 = arith.select %4, %0, %5 : vector<8x32xi1>, vector<8x32xf32>
    %cst_3 = arith.constant dense<0.000000e+00> : vector<8xf32>
    %7 = vector.multi_reduction <add>, %6, %cst_3 [1] : vector<8x32xf32> to vector<8xf32>
    %8 = vector.shape_cast %7 : vector<8xf32> to vector<8x1xf32>
    %9 = arith.mulf %0, %0 : vector<8x32xf32>
    %cst_4 = arith.constant dense<0.000000e+00> : vector<8xf32>
    %10 = vector.multi_reduction <add>, %9, %cst_4 [1] : vector<8x32xf32> to vector<8xf32>
    %11 = vector.shape_cast %10 : vector<8xf32> to vector<8x1xf32>
    %12 = math.sqrt %11 : vector<8x1xf32>
    %cst_5 = arith.constant dense<0xFF800000> : vector<8xf32>
    %13 = vector.multi_reduction <maximumf>, %0, %cst_5 [1] : vector<8x32xf32> to vector<8xf32>
    %14 = vector.shape_cast %13 : vector<8xf32> to vector<8x1xf32>
    %cst_6 = arith.constant 9.99999993E-9 : f32
    %15 = vector.broadcast %cst_6 : f32 to vector<8x1xf32>
    %16 = arith.maximumf %12, %15 : vector<8x1xf32>
    %17 = tpu.reciprocal %16 : vector<8x1xf32> -> vector<8x1xf32>
    %cst_7 = arith.constant 9.99999996E-13 : f32
    %18 = vector.broadcast %cst_7 : f32 to vector<8x1xf32>
    %19 = arith.maximumf %12, %18 : vector<8x1xf32>
    %20 = tpu.reciprocal %19 : vector<8x1xf32> -> vector<8x1xf32>
    %21 = arith.mulf %8, %17 : vector<8x1xf32>
    %22 = vector.broadcast %14 : vector<8x1xf32> to vector<8x32xf32>
    %23 = arith.subf %0, %22 : vector<8x32xf32>
    %24 = vector.broadcast %20 : vector<8x1xf32> to vector<8x32xf32>
    %25 = arith.mulf %23, %24 : vector<8x32xf32>
    %26 = math.exp %25 : vector<8x32xf32>
    %cst_8 = arith.constant dense<0.000000e+00> : vector<8xf32>
    %27 = vector.multi_reduction <add>, %26, %cst_8 [1] : vector<8x32xf32> to vector<8xf32>
    %28 = vector.shape_cast %27 : vector<8xf32> to vector<8x1xf32>
    %29 = math.log %28 : vector<8x1xf32>
    %30 = arith.subf %8, %14 : vector<8x1xf32>
    %31 = arith.mulf %30, %20 : vector<8x1xf32>
    %32 = arith.subf %31, %29 : vector<8x1xf32>
    %cst_9 = arith.constant 0.000000e+00 : f32
    %33 = vector.broadcast %cst_9 : f32 to vector<8x1xf32>
    %34 = arith.subf %33, %32 : vector<8x1xf32>
    %cst_10 = arith.constant 0.000000e+00 : f32
    %35 = vector.broadcast %cst_10 : f32 to vector<8x1xf32>
    %36 = arith.subf %35, %34 : vector<8x1xf32>
    %37 = math.exp %36 : vector<8x1xf32>
    %cst_11 = arith.constant 1.000000e+00 : f32
    %38 = vector.broadcast %cst_11 : f32 to vector<8x1xf32>
    %39 = arith.subf %38, %37 : vector<8x1xf32>
    %cst_12 = arith.constant 0.000000e+00 : f32
    %40 = vector.broadcast %cst_12 : f32 to vector<8x1xf32>
    %41 = arith.maximumf %39, %40 : vector<8x1xf32>
    %42 = arith.mulf %41, %41 : vector<8x1xf32>
    %cst_13 = arith.constant 1.000000e+00 : f32
    %43 = vector.broadcast %cst_13 : f32 to vector<8x1xf32>
    %44 = arith.mulf %43, %42 : vector<8x1xf32>
    %45 = arith.mulf %44, %34 : vector<8x1xf32>
    %cst_14 = arith.constant 1.000000e+00 : f32
    %46 = vector.broadcast %cst_14 : f32 to vector<8x1xf32>
    %47 = arith.subf %46, %21 : vector<8x1xf32>
    %48 = vector.shape_cast %47 : vector<8x1xf32> to vector<1x8x1xf32>
    %cst_15 = arith.constant dense<0.000000e+00> : vector<1xf32>
    %49 = vector.multi_reduction <add>, %48, %cst_15 [1, 2] : vector<1x8x1xf32> to vector<1xf32>
    %50 = vector.shape_cast %49 : vector<1xf32> to vector<1x1x1xf32>
    %51 = vector.extract %50[0, 0, 0] : f32 from vector<1x1x1xf32>
    %52 = vector.shape_cast %45 : vector<8x1xf32> to vector<1x8x1xf32>
    %cst_16 = arith.constant dense<0.000000e+00> : vector<1xf32>
    %53 = vector.multi_reduction <add>, %52, %cst_16 [1, 2] : vector<1x8x1xf32> to vector<1xf32>
    %54 = vector.shape_cast %53 : vector<1xf32> to vector<1x1x1xf32>
    %55 = vector.extract %54[0, 0, 0] : f32 from vector<1x1x1xf32>
    %56 = tpu.iota {dimensions = array<i32: 2>} : vector<1x8x128xi32>
    %c0_i32 = arith.constant 0 : i32
    %57 = vector.broadcast %c0_i32 : i32 to vector<1x8x128xi32>
    %58 = arith.cmpi eq, %56, %57 : vector<1x8x128xi32>
    %c1_i32 = arith.constant 1 : i32
    %59 = vector.broadcast %c1_i32 : i32 to vector<1x8x128xi32>
    %60 = arith.cmpi eq, %56, %59 : vector<1x8x128xi32>
    %cst_17 = arith.constant 0.000000e+00 : f32
    %61 = vector.broadcast %55 : f32 to vector<1x8x128xf32>
    %62 = vector.broadcast %cst_17 : f32 to vector<1x8x128xf32>
    %63 = arith.select %60, %61, %62 : vector<1x8x128xi1>, vector<1x8x128xf32>
    %64 = vector.broadcast %51 : f32 to vector<1x8x128xf32>
    %65 = arith.select %58, %64, %63 : vector<1x8x128xi1>, vector<1x8x128xf32>
    %c0_18 = arith.constant 0 : index
    %c0_19 = arith.constant 0 : index
    %c0_20 = arith.constant 0 : index
    %66 = vector.load %arg3[%c0_18, %c0_19, %c0_20] : memref<1x8x128xf32, #tpu.memory_space<vmem>>, vector<1x8x128xf32>
    tpu.vector_store %arg3[%c0_18, %c0_19, %c0_20], %65 {strides = array<i32>} : memref<1x8x128xf32, #tpu.memory_space<vmem>>, vector<1x8x128xf32>,
    return
  }
  func.func @transform_0(%arg0: i32) -> (i32, i32) {
    %c0_i32 = arith.constant 0 : i32
    %c0_i32_0 = arith.constant 0 : i32
    return %arg0, %c0_i32 : i32, i32
  }
  func.func @transform_1(%arg0: i32) -> (i32, i32) {
    %c0_i32 = arith.constant 0 : i32
    %c0_i32_0 = arith.constant 0 : i32
    return %arg0, %c0_i32 : i32, i32
  }
  func.func @transform_2(%arg0: i32) -> (i32, i32, i32) {
    %c0_i32 = arith.constant 0 : i32
    %c0_i32_0 = arith.constant 0 : i32
    %c0_i32_1 = arith.constant 0 : i32
    return %arg0, %c0_i32, %c0_i32_0 : i32, i32, i32
  }
}

</mosaic_0001>

<llo_original>
// kernel: tpu_custom_call.1
$region0: #{tpu_custom_call.1}
  #allocation0 [shape = 'u32[]', space=smem, size = 0x4, offset = 0x4, fixed_abs, tag = 'smem constant byte address 0x4 - core index']
  #allocation1 [shape = 'u32[72,128]{1,0:T(1,128)}', space=vmem, size = 0x9000, scoped, tag = 'internal scratch']
  %s0 = inlined_call_operand.vmem [shape: f32[8,32], index: 0, kind: input, shape index: {}]
  %s1 = inlined_call_operand.vmem [shape: s32[8,1], index: 1, kind: input, shape index: {}]
  %s2 = inlined_call_operand.hbm [shape: f32[1,8,128], index: 2, kind: output, shape index: {}]
  %s3 = sld [smem:[#allocation0]]
  $region18: #{tpu_custom_call.1} parent=0
    _
  %s5 = ssub.s32 1, %s3
  %s6 = scalar_select 0, %s5, %s3
  $region1: #{tpu_custom_call.1} parent=0
    #allocation2 [shape = 'u8[4096]{0}', space=vmem, size = 0x1000, scoped, tag = 'output window, operand 0, single buffered']
    #allocation3 [shape = 's32[1]{0}', space=sflag, size = 0x4, scoped, tag = 'scoped memory for tpu_custom_call.1']
    %7 = vsyncpa [#allocation3], 0
    // Predicated region
    $region2: #{tpu_custom_call.1} parent=1 // pred_check
      _
    $region3: #{tpu_custom_call.1} parent=1 // pred_check_branch
      %9 = sbr.rel (0) target = $region5
    $region4: #{tpu_custom_call.1} parent=1 // pred_region
      _
    $region5: #{tpu_custom_call.1} parent=1 // pred_fallthru
      _
    // Predicated region
    $region6: #{tpu_custom_call.1} parent=1 // pred_check
      _
    $region7: #{tpu_custom_call.1} parent=1 // pred_check_branch
      %11 = sbr.rel (0) target = $region9
    $region8: #{tpu_custom_call.1} parent=1 // pred_region
      _
    $region9: #{tpu_custom_call.1} parent=1 // pred_fallthru
      _
    %v12 = vld [vmem:[%s0] sm:$0xff]
    %v13 = vld [vmem:[%s1] sm:$0xff]
    %v14 = vlaneseq
    %v15 = vand.u32 %v14, 127
    %16 = vset.pattern.permute.xlu0 0
    %17 = vperm.xlu0 %16, %v13
    %v18 = vpop.permute.xlu0 %17
    %vm19 = vcmp.eq.s32.totalorder %v15, %v18
    %v20 = vsel %vm19, %v12, 0.0
    %vm21 = vcmask 261120
    %v22 = vsel %vm21, %v20, 0.0
    %23 = vadd.xlane.f32.xlu0 %v22
    %v24 = vpop.xlane.xlu0 %23
    %v25 = vmul.f32 %v12, %v12
    %v26 = vsel %vm21, %v25, 0.0
    %27 = vadd.xlane.f32.xlu0 %v26
    %v28 = vpop.xlane.xlu0 %27
    %v29 = vrsqrt.pop %v28
    %v30 = vmul.f32 %v29, %v28
    %v31 = vmul.f32 %v30, %v29
    %v32 = vmul.f32 0.5, %v31
    %v33 = vsub.f32 1.5, %v32
    %v34 = vmul.f32 %v29, %v33
    %v35 = vmul.f32 %v28, %v34
    %vm36 = vcmp.eq.f32.partialorder %v28, inf
    %v37 = vsel %vm36, %v28, %v35
    %vm38 = vcmp.eq.f32.partialorder %v28, 0.0
    %v39 = vand.u32 %v28, 2147483648
    %v40 = vsel %vm38, %v39, %v37
    %v41 = vsel %vm21, %v12, -inf
    %42 = vmax.xlane.f32.xlu0 %v41
    %v43 = vpop.xlane.xlu0 %42
    %v44 = vmax.f32 %v40, 1e-08
    %v45 = vrcp.pop %v44
    %v46 = vmul.f32 %v44, %v45
    %v47 = vsub.f32 1.0, %v46
    %v48 = vmul.f32 %v45, %v47
    %v49 = vadd.f32 %v45, %v48
    %vm50 = vweird.f32 %v44
    %vm51 = vweird.f32 %v45
    %vm52 = vmor %vm50, %vm51
    %v53 = vsel %vm52, %v45, %v49
    %v54 = vand.u32 2147483647, %v44
    %vm55 = vcmp.eq.f32.partialorder %v54, 8.507059e+37
    %v56 = vand.u32 %v44, 2147483648
    %v57 = vor.u32 1.1754944e-38, %v56
    %v58 = vsel %vm55, %v57, %v53
    %v59 = vmax.f32 %v40, 1e-12
    %v60 = vrcp.pop %v59
    %v61 = vmul.f32 %v59, %v60
    %v62 = vsub.f32 1.0, %v61
    %v63 = vmul.f32 %v60, %v62
    %v64 = vadd.f32 %v60, %v63
    %vm65 = vweird.f32 %v59
    %vm66 = vweird.f32 %v60
    %vm67 = vmor %vm65, %vm66
    %v68 = vsel %vm67, %v60, %v64
    %v69 = vand.u32 2147483647, %v59
    %vm70 = vcmp.eq.f32.partialorder %v69, 8.507059e+37
    %v71 = vand.u32 %v59, 2147483648
    %v72 = vor.u32 1.1754944e-38, %v71
    %v73 = vsel %vm70, %v72, %v68
    %v74 = vmul.f32 %v24, %v58
    %v75 = vsub.f32 %v12, %v43
    %v76 = vmul.f32 %v75, %v73
    %v77 = vmul.f32 %v76, 1.442695
    %v78 = vpow.pop %v77
    %v79 = vsel %vm21, %v78, 0.0
    %80 = vadd.xlane.f32.xlu0 %v79
    %v81 = vpop.xlane.xlu0 %80
    %v82 = vlog2.pop %v81
    %v83 = vmul.f32 %v82, 0.6931472
    %v84 = vsub.f32 %v24, %v43
    %v85 = vmul.f32 %v84, %v73
    %v86 = vsub.f32 %v85, %v83
    %v87 = vsub.f32 0.0, %v86
    %v88 = vsub.f32 0.0, %v87
    %v89 = vmul.f32 %v88, 1.442695
    %v90 = vpow.pop %v89
    %v91 = vsub.f32 1.0, %v90
    %v92 = vmax.f32 %v91, 0.0
    %v93 = vmul.f32 %v92, %v92
    %v94 = vmul.f32 %v93, %v87
    %v95 = vsub.f32 1.0, %v74
    %vm96 = vcmask 7168
    %v97 = vsel %vm96, %v95, 0.0
    %98 = vadd.xlane.f32.xlu0 %v97
    %v99 = vpop.xlane.xlu0 %98
    %v100 = vrot.slane %v99, 4
    %v101 = vadd.f32 %v99, %v100
    %v102 = vrot.slane %v101, 2
    %v103 = vadd.f32 %v101, %v102
    %v104 = vrot.slane %v103, 1
    %v105 = vadd.f32 %v103, %v104
    %s106 = vtos %v105
    %v107 = vsel %vm96, %v94, 0.0
    %108 = vadd.xlane.f32.xlu0 %v107
    %v109 = vpop.xlane.xlu0 %108
    %v110 = vrot.slane %v109, 4
    %v111 = vadd.f32 %v109, %v110
    %v112 = vrot.slane %v111, 2
    %v113 = vadd.f32 %v111, %v112
    %v114 = vrot.slane %v113, 1
    %v115 = vadd.f32 %v113, %v114
    %s116 = vtos %v115
    %vm117 = vcmp.eq.s32.totalorder %v15, 0
    %vm118 = vcmp.eq.s32.totalorder %v15, 1
    %v119 = vstv %s116
    %v120 = vsel %vm118, %v119, 0.0
    %v121 = vstv %s106
    %v122 = vsel %vm117, %v121, %v120
    %123 = vst [vmem:[#allocation2] sm:$0xff] %v122
    // Predicated region
    $region10: #{tpu_custom_call.1} parent=1 // pred_check
      _
    $region11: #{tpu_custom_call.1} parent=1 // pred_check_branch
      %125 = sbr.rel (0) target = $region13
    $region12: #{tpu_custom_call.1} parent=1 // pred_region
      %127 = vsyncadd [#allocation3], 0
      %s129 = sshll.u32 [#allocation2], 4
      %s130 = int_to_ptr.vmem [resolvable:$true] %s129
      %s131 = sshll.u32 %s2, 4
      %s132 = int_to_ptr.hbm [resolvable:$true] %s131
      %134 = dma.vmem_to_hbm [thread:$0]  %s130, 128, %s132, [#allocation3]
    $region13: #{tpu_custom_call.1} parent=1 // pred_fallthru
      _
    // Predicated region
    $region14: #{tpu_custom_call.1} parent=1 // pred_check
      _
    $region15: #{tpu_custom_call.1} parent=1 // pred_check_branch
      %136 = sbr.rel (0) target = $region17
    $region16: #{tpu_custom_call.1} parent=1 // pred_region
      %138 = dma.done [#allocation3], 128
    $region17: #{tpu_custom_call.1} parent=1 // pred_fallthru
      _
    %139 = vsyncpa [#allocation3], 1

</llo_original>
